<compile_context>
chip_gen: v7x
topology: tpu7x:2x2x1
jax: 0.10.0
libtpu: 0.0.40
codegen_flags: <defaults>
</compile_context>

<pallas_src>
import math

import jax
import jax.numpy as jnp
from jax.experimental import pallas as pl
from jax.experimental.pallas import tpu as pltpu


def _decoder_kernel(z_ref, w0_ref, b0_ref, w1_ref, b1_ref, w2_ref, b2_ref, o_ref):
    """Fused 3-layer MLP: (Linear->ReLU) x2 -> Linear -> Sigmoid.

    Matmuls run on the MXU (bf16 inputs, f32 accumulation); bias-add / ReLU /
    sigmoid run in f32 on the VPU/EUP. No HBM round-trips between layers.
    """
    # layer 0: latent -> h1, ReLU
    h = jnp.dot(z_ref[...], w0_ref[...], preferred_element_type=jnp.float32)
    h = jnp.maximum(h + b0_ref[...], 0.0)

    # layer 1: h1 -> h2, ReLU
    h = jnp.dot(h.astype(jnp.bfloat16), w1_ref[...],
                preferred_element_type=jnp.float32)
    h = jnp.maximum(h + b1_ref[...], 0.0)

    # layer 2: h2 -> out (column tile), Sigmoid
    h = jnp.dot(h.astype(jnp.bfloat16), w2_ref[...],
                preferred_element_type=jnp.float32)
    o_ref[...] = jax.nn.sigmoid(h + b2_ref[...]).astype(o_ref.dtype)


def _round_up(x, m):
    return (x + m - 1) // m * m


def _pad2(a, rows, cols, dtype):
    r, c = a.shape
    return jnp.pad(a, ((0, rows - r), (0, cols - c))).astype(dtype)


def bootstraps_decoder_forward(z, params, *, block_b=512, block_n=512):
    """Run the fused decoder kernel.

    z:      [B, latent_dim] float32
    params: dict with w0 [latent_dim, h1], b0 [1, h1],
                      w1 [h1, h2],         b1 [1, h2],
                      w2 [h2, out_size],   b2 [1, out_size]
    Returns [B, out_size] float32.
    """
    B, latent_dim = z.shape
    w0, b0 = params["w0"], params["b0"]
    w1, b1 = params["w1"], params["b1"]
    w2, b2 = params["w2"], params["b2"]
    h1, h2, out_size = w0.shape[1], w1.shape[1], w2.shape[1]

    # ---- lane-dense padding of feature dims (multiples of 128) -------------
    h1_p = _round_up(h1, 128)
    h2_p = _round_up(h2, 128)
    out_p = _round_up(out_size, 128)
    if out_p <= block_n:
        block_n = out_p                       # single output-column tile
    else:
        out_p = _round_up(out_p, block_n)     # tile w2 / out along columns

    # ---- batch tiling (multiple of 16 for bf16 sublane packing) ------------
    block_b = min(block_b, _round_up(B, 16))
    B_p = _round_up(B, block_b)

    # ---- pad + cast operands ------------------------------------------------
    z_p = jnp.pad(z, ((0, B_p - B), (0, 0))).astype(jnp.bfloat16)
    w0_p = _pad2(w0, latent_dim, h1_p, jnp.bfloat16)
    b0_p = _pad2(b0, 1, h1_p, jnp.float32)
    w1_p = _pad2(w1, h1_p, h2_p, jnp.bfloat16)
    b1_p = _pad2(b1, 1, h2_p, jnp.float32)
    w2_p = _pad2(w2, h2_p, out_p, jnp.bfloat16)
    b2_p = _pad2(b2, 1, out_p, jnp.float32)

    grid = (B_p // block_b, out_p // block_n)

    # ---- VMEM budget (double-buffered blocks) + headroom, capped for v7x ---
    tile_bytes = (
        block_b * latent_dim * 2          # z tile (bf16)
        + block_b * block_n * 4           # out tile (f32)
        + latent_dim * h1_p * 2           # w0 (bf16)
        + h1_p * h2_p * 2                 # w1 (bf16)
        + h2_p * block_n * 2              # w2 column tile (bf16)
        + (h1_p + h2_p + block_n) * 4     # biases (f32)
    )
    vmem_limit = int(min(max(4 * tile_bytes, 32 * 1024 * 1024),
                         60 * 1024 * 1024))

    out_padded = pl.pallas_call(
        _decoder_kernel,
        out_shape=jax.ShapeDtypeStruct((B_p, out_p), jnp.float32),
        grid_spec=pltpu.PrefetchScalarGridSpec(
            num_scalar_prefetch=0,
            grid=grid,
            in_specs=[
                pl.BlockSpec((block_b, latent_dim), lambda i, j: (i, 0)),  # z
                pl.BlockSpec((latent_dim, h1_p), lambda i, j: (0, 0)),     # w0
                pl.BlockSpec((1, h1_p), lambda i, j: (0, 0)),              # b0
                pl.BlockSpec((h1_p, h2_p), lambda i, j: (0, 0)),           # w1
                pl.BlockSpec((1, h2_p), lambda i, j: (0, 0)),              # b1
                pl.BlockSpec((h2_p, block_n), lambda i, j: (0, j)),        # w2
                pl.BlockSpec((1, block_n), lambda i, j: (0, j)),           # b2
            ],
            out_specs=pl.BlockSpec((block_b, block_n), lambda i, j: (i, j)),
        ),
        compiler_params=pltpu.CompilerParams(
            dimension_semantics=("parallel", "parallel"),
            vmem_limit_bytes=vmem_limit,
        ),
    )(z_p, w0_p, b0_p, w1_p, b1_p, w2_p, b2_p)

    return out_padded[:B, :out_size]


def init_params(key, latent_dim, out_size):
    """Deterministic init mirroring nn.Linear's U(-1/sqrt(fan_in), 1/sqrt(fan_in))."""
    h1 = math.ceil(out_size / 4)
    h2 = math.ceil(out_size / 2)
    dims = [(latent_dim, h1), (h1, h2), (h2, out_size)]
    params = {}
    keys = jax.random.split(key, 2 * len(dims))
    for idx, (fan_in, fan_out) in enumerate(dims):
        bound = 1.0 / math.sqrt(fan_in)
        params[f"w{idx}"] = jax.random.uniform(
            keys[2 * idx], (fan_in, fan_out), jnp.float32, -bound, bound)
        params[f"b{idx}"] = jax.random.uniform(
            keys[2 * idx + 1], (1, fan_out), jnp.float32, -bound, bound)
    return params


def reference_forward(z, params, matmul_dtype=jnp.float32):
    """Pure-JAX reference. matmul_dtype=bfloat16 emulates the kernel's MXU path."""
    def lin(x, w, b):
        return jnp.dot(x.astype(matmul_dtype), w.astype(matmul_dtype),
                       preferred_element_type=jnp.float32) + b
    h = jnp.maximum(lin(z, params["w0"], params["b0"]), 0.0)
    h = jnp.maximum(lin(h, params["w1"], params["b1"]), 0.0)
    return jax.nn.sigmoid(lin(h, params["w2"], params["b2"]))


if __name__ == "__main__":
    latent_dim = 32
    out_size = 64          # h1 = ceil(64/4) = 16, h2 = ceil(64/2) = 32
    batch = 8

    key = jax.random.PRNGKey(0)
    k_z, k_p = jax.random.split(key)
    z = jax.random.normal(k_z, (batch, latent_dim), dtype=jnp.float32)
    params = init_params(k_p, latent_dim, out_size)

    fwd = jax.jit(bootstraps_decoder_forward)
    out = jax.block_until_ready(fwd(z, params))
    assert out.shape == (batch, out_size)

    # tight check vs. a reference using the same bf16-matmul / f32-accumulate path
    ref_bf16 = reference_forward(z, params, matmul_dtype=jnp.bfloat16)
    assert jnp.allclose(out, ref_bf16, atol=1e-3, rtol=1e-3), "mismatch vs bf16 reference"

    # loose check vs. the pure-f32 reference (bf16 matmul inputs round slightly)
    ref_f32 = reference_forward(z, params, matmul_dtype=jnp.float32)
    assert jnp.allclose(out, ref_f32, atol=3e-2, rtol=3e-2), "mismatch vs f32 reference"

    print("KERNEL_OK")
</pallas_src>

<mosaic_0001>
module attributes {stable_mosaic.version = 11 : i64} {
  func.func @_decoder_kernel(%arg0: i32, %arg1: i32, %arg2: memref<16x32xbf16, #tpu.memory_space<vmem>>, %arg3: memref<32x128xbf16, #tpu.memory_space<vmem>>, %arg4: memref<1x128xf32, #tpu.memory_space<vmem>>, %arg5: memref<128x128xbf16, #tpu.memory_space<vmem>>, %arg6: memref<1x128xf32, #tpu.memory_space<vmem>>, %arg7: memref<128x128xbf16, #tpu.memory_space<vmem>>, %arg8: memref<1x128xf32, #tpu.memory_space<vmem>>, %arg9: memref<16x128xf32, #tpu.memory_space<vmem>>) attributes {dimension_semantics = [#tpu.dimension_semantics<parallel>, #tpu.dimension_semantics<parallel>], iteration_bounds = array<i64: 1, 1>, scalar_prefetch = 0 : i64, scratch_operands = 0 : i64, tpu.core_type = #tpu.core_type<tc>, window_params = [{transform_indices = @transform_0, window_bounds = array<i64: 16, 32>}, {pipeline_mode = #tpu.pipeline_mode<synchronous>, transform_indices = @transform_1, window_bounds = array<i64: 32, 128>}, {pipeline_mode = #tpu.pipeline_mode<synchronous>, transform_indices = @transform_2, window_bounds = array<i64: 1, 128>}, {pipeline_mode = #tpu.pipeline_mode<synchronous>, transform_indices = @transform_3, window_bounds = array<i64: 128, 128>}, {pipeline_mode = #tpu.pipeline_mode<synchronous>, transform_indices = @transform_4, window_bounds = array<i64: 1, 128>}, {transform_indices = @transform_5, window_bounds = array<i64: 128, 128>}, {transform_indices = @transform_6, window_bounds = array<i64: 1, 128>}, {transform_indices = @transform_7, window_bounds = array<i64: 16, 128>}]} {
    %c0 = arith.constant 0 : index
    %c0_0 = arith.constant 0 : index
    %0 = vector.load %arg2[%c0, %c0_0] : memref<16x32xbf16, #tpu.memory_space<vmem>>, vector<16x32xbf16>
    %c0_1 = arith.constant 0 : index
    %c0_2 = arith.constant 0 : index
    %1 = vector.load %arg3[%c0_1, %c0_2] : memref<32x128xbf16, #tpu.memory_space<vmem>>, vector<32x128xbf16>
    %cst = arith.constant dense<0.000000e+00> : vector<16x128xf32>
    %2 = tpu.matmul %0, %1, %cst {dimension_numbers = #tpu.dot_dimension_numbers<[1], [0], [0], [1], [0, 0, 1, 1], [], []>} : vector<16x32xbf16>, vector<32x128xbf16>, vector<16x128xf32> -> vector<16x128xf32>
    %c0_3 = arith.constant 0 : index
    %c0_4 = arith.constant 0 : index
    %3 = vector.load %arg4[%c0_3, %c0_4] : memref<1x128xf32, #tpu.memory_space<vmem>>, vector<1x128xf32>
    %4 = vector.broadcast %3 : vector<1x128xf32> to vector<16x128xf32>
    %5 = arith.addf %2, %4 : vector<16x128xf32>
    %cst_5 = arith.constant 0.000000e+00 : f32
    %6 = vector.broadcast %cst_5 : f32 to vector<16x128xf32>
    %7 = arith.maximumf %5, %6 : vector<16x128xf32>
    %8 = arith.truncf %7 : vector<16x128xf32> to vector<16x128xbf16>
    %c0_6 = arith.constant 0 : index
    %c0_7 = arith.constant 0 : index
    %9 = vector.load %arg5[%c0_6, %c0_7] : memref<128x128xbf16, #tpu.memory_space<vmem>>, vector<128x128xbf16>
    %cst_8 = arith.constant dense<0.000000e+00> : vector<16x128xf32>
    %10 = tpu.matmul %8, %9, %cst_8 {dimension_numbers = #tpu.dot_dimension_numbers<[1], [0], [0], [1], [0, 0, 1, 1], [], []>} : vector<16x128xbf16>, vector<128x128xbf16>, vector<16x128xf32> -> vector<16x128xf32>
    %c0_9 = arith.constant 0 : index
    %c0_10 = arith.constant 0 : index
    %11 = vector.load %arg6[%c0_9, %c0_10] : memref<1x128xf32, #tpu.memory_space<vmem>>, vector<1x128xf32>
    %12 = vector.broadcast %11 : vector<1x128xf32> to vector<16x128xf32>
    %13 = arith.addf %10, %12 : vector<16x128xf32>
    %cst_11 = arith.constant 0.000000e+00 : f32
    %14 = vector.broadcast %cst_11 : f32 to vector<16x128xf32>
    %15 = arith.maximumf %13, %14 : vector<16x128xf32>
    %16 = arith.truncf %15 : vector<16x128xf32> to vector<16x128xbf16>
    %c0_12 = arith.constant 0 : index
    %c0_13 = arith.constant 0 : index
    %17 = vector.load %arg7[%c0_12, %c0_13] : memref<128x128xbf16, #tpu.memory_space<vmem>>, vector<128x128xbf16>
    %cst_14 = arith.constant dense<0.000000e+00> : vector<16x128xf32>
    %18 = tpu.matmul %16, %17, %cst_14 {dimension_numbers = #tpu.dot_dimension_numbers<[1], [0], [0], [1], [0, 0, 1, 1], [], []>} : vector<16x128xbf16>, vector<128x128xbf16>, vector<16x128xf32> -> vector<16x128xf32>
    %c0_15 = arith.constant 0 : index
    %c0_16 = arith.constant 0 : index
    %19 = vector.load %arg8[%c0_15, %c0_16] : memref<1x128xf32, #tpu.memory_space<vmem>>, vector<1x128xf32>
    %20 = vector.broadcast %19 : vector<1x128xf32> to vector<16x128xf32>
    %21 = arith.addf %18, %20 : vector<16x128xf32>
    %22 = arith.negf %21 : vector<16x128xf32>
    %23 = math.exp %22 : vector<16x128xf32>
    %cst_17 = arith.constant 1.000000e+00 : f32
    %24 = vector.broadcast %cst_17 : f32 to vector<16x128xf32>
    %25 = arith.addf %24, %23 : vector<16x128xf32>
    %26 = arith.divf %24, %25 : vector<16x128xf32>
    %c0_18 = arith.constant 0 : index
    %c0_19 = arith.constant 0 : index
    %27 = vector.load %arg9[%c0_18, %c0_19] : memref<16x128xf32, #tpu.memory_space<vmem>>, vector<16x128xf32>
    tpu.vector_store %arg9[%c0_18, %c0_19], %26 {strides = array<i32>} : memref<16x128xf32, #tpu.memory_space<vmem>>, vector<16x128xf32>,
    return
  }
  func.func @transform_0(%arg0: i32, %arg1: i32) -> (i32, i32) {
    %c0_i32 = arith.constant 0 : i32
    %c0_i32_0 = arith.constant 0 : i32
    return %arg0, %c0_i32 : i32, i32
  }
  func.func @transform_1(%arg0: i32, %arg1: i32) -> (i32, i32) {
    %c0_i32 = arith.constant 0 : i32
    %c0_i32_0 = arith.constant 0 : i32
    %c0_i32_1 = arith.constant 0 : i32
    return %c0_i32, %c0_i32_0 : i32, i32
  }
  func.func @transform_2(%arg0: i32, %arg1: i32) -> (i32, i32) {
    %c0_i32 = arith.constant 0 : i32
    %c0_i32_0 = arith.constant 0 : i32
    %c0_i32_1 = arith.constant 0 : i32
    return %c0_i32, %c0_i32_0 : i32, i32
  }
  func.func @transform_3(%arg0: i32, %arg1: i32) -> (i32, i32) {
    %c0_i32 = arith.constant 0 : i32
    %c0_i32_0 = arith.constant 0 : i32
    %c0_i32_1 = arith.constant 0 : i32
    return %c0_i32, %c0_i32_0 : i32, i32
  }
  func.func @transform_4(%arg0: i32, %arg1: i32) -> (i32, i32) {
    %c0_i32 = arith.constant 0 : i32
    %c0_i32_0 = arith.constant 0 : i32
    %c0_i32_1 = arith.constant 0 : i32
    return %c0_i32, %c0_i32_0 : i32, i32
  }
  func.func @transform_5(%arg0: i32, %arg1: i32) -> (i32, i32) {
    %c0_i32 = arith.constant 0 : i32
    %c0_i32_0 = arith.constant 0 : i32
    return %c0_i32, %arg1 : i32, i32
  }
  func.func @transform_6(%arg0: i32, %arg1: i32) -> (i32, i32) {
    %c0_i32 = arith.constant 0 : i32
    %c0_i32_0 = arith.constant 0 : i32
    return %c0_i32, %arg1 : i32, i32
  }
  func.func @transform_7(%arg0: i32, %arg1: i32) -> (i32, i32) {
    %c0_i32 = arith.constant 0 : i32
    return %arg0, %arg1 : i32, i32
  }
}

</mosaic_0001>

<llo_original>
// kernel: bootstraps_decoder_forward.1
$region0: #{bootstraps_decoder_forward.1}
  #allocation0 [shape = 'u32[]', space=smem, size = 0x4, offset = 0x4, fixed_abs, tag = 'smem constant byte address 0x4 - core index']
  #allocation1 [shape = 'u32[144,128]{1,0:T(1,128)}', space=vmem, size = 0x12000, scoped, tag = 'internal scratch']
  %s0 = inlined_call_operand.vmem [shape: bf16[16,32], index: 0, kind: input, shape index: {}]
  %s1 = inlined_call_operand.vmem [shape: bf16[32,128], index: 1, kind: input, shape index: {}]
  %s2 = inlined_call_operand.vmem [shape: f32[1,128], index: 2, kind: input, shape index: {}]
  %s3 = inlined_call_operand.vmem [shape: bf16[128,128], index: 3, kind: input, shape index: {}]
  %s4 = inlined_call_operand.vmem [shape: f32[1,128], index: 4, kind: input, shape index: {}]
  %s5 = inlined_call_operand.vmem [shape: bf16[128,128], index: 5, kind: input, shape index: {}]
  %s6 = inlined_call_operand.vmem [shape: f32[1,128], index: 6, kind: input, shape index: {}]
  %s7 = inlined_call_operand.vmem [shape: f32[16,128], index: 7, kind: output, shape index: {}]
  %s8 = sld [smem:[#allocation0]]
  $region38: #{bootstraps_decoder_forward.1} parent=0
    _
  %s10 = ssub.s32 1, %s8
  %s11 = scalar_select 0, %s10, %s8
  // Predicated region
  $region2: #{bootstraps_decoder_forward.1} parent=0 // pred_check
    _
  $region3: #{bootstraps_decoder_forward.1} parent=0 // pred_check_branch
    %13 = sbr.rel (0) target = $region5
  $region4: #{bootstraps_decoder_forward.1} parent=0 // pred_region
    _
  $region5: #{bootstraps_decoder_forward.1} parent=0 // pred_fallthru
    _
  // Predicated region
  $region6: #{bootstraps_decoder_forward.1} parent=0 // pred_check
    _
  $region7: #{bootstraps_decoder_forward.1} parent=0 // pred_check_branch
    %15 = sbr.rel (0) target = $region9
  $region8: #{bootstraps_decoder_forward.1} parent=0 // pred_region
    _
  $region9: #{bootstraps_decoder_forward.1} parent=0 // pred_fallthru
    _
  // Predicated region
  $region10: #{bootstraps_decoder_forward.1} parent=0 // pred_check
    _
  $region11: #{bootstraps_decoder_forward.1} parent=0 // pred_check_branch
    %17 = sbr.rel (0) target = $region13
  $region12: #{bootstraps_decoder_forward.1} parent=0 // pred_region
    _
  $region13: #{bootstraps_decoder_forward.1} parent=0 // pred_fallthru
    _
  // Predicated region
  $region14: #{bootstraps_decoder_forward.1} parent=0 // pred_check
    _
  $region15: #{bootstraps_decoder_forward.1} parent=0 // pred_check_branch
    %19 = sbr.rel (0) target = $region17
  $region16: #{bootstraps_decoder_forward.1} parent=0 // pred_region
    _
  $region17: #{bootstraps_decoder_forward.1} parent=0 // pred_fallthru
    _
  // Predicated region
  $region18: #{bootstraps_decoder_forward.1} parent=0 // pred_check
    _
  $region19: #{bootstraps_decoder_forward.1} parent=0 // pred_check_branch
    %21 = sbr.rel (0) target = $region21
  $region20: #{bootstraps_decoder_forward.1} parent=0 // pred_region
    _
  $region21: #{bootstraps_decoder_forward.1} parent=0 // pred_fallthru
    _
  // Predicated region
  $region22: #{bootstraps_decoder_forward.1} parent=0 // pred_check
    _
  $region23: #{bootstraps_decoder_forward.1} parent=0 // pred_check_branch
    %23 = sbr.rel (0) target = $region25
  $region24: #{bootstraps_decoder_forward.1} parent=0 // pred_region
    _
  $region25: #{bootstraps_decoder_forward.1} parent=0 // pred_fallthru
    _
  // Predicated region
  $region26: #{bootstraps_decoder_forward.1} parent=0 // pred_check
    _
  $region27: #{bootstraps_decoder_forward.1} parent=0 // pred_check_branch
    %25 = sbr.rel (0) target = $region29
  $region28: #{bootstraps_decoder_forward.1} parent=0 // pred_region
    _
  $region29: #{bootstraps_decoder_forward.1} parent=0 // pred_fallthru
    _
  %v27 = vld [vmem:[%s0] sm:$0xf]
  %v28 = vld [vmem:[%s0 + $0x4] sm:$0xf]
  %v29 = vld [vmem:[%s1] sm:$0xf]
  %v30 = vld [vmem:[%s1 + $0x4] sm:$0xf]
  %v31 = vld [vmem:[%s1 + $0x8] sm:$0xf]
  %v32 = vld [vmem:[%s1 + $0xc] sm:$0xf]
  %v33 = vld [vmem:[%s2] sm:$0x1]
  %v35 = vlaneseq
  %v36 = vshrl.u32 %v35, 7
  %v37 = vsub.s32 0, %v36
  %v38 = vrot.slane %v33, %v37
  %v42 = vunpack.c.l.b16 %v27
  %v43 = vunpack.c.l.b16 %v28
  %v44 = vpack.c.b16 %v43, %v42
  %v49 = vunpack.c.l.b16 %v29
  %v50 = vunpack.c.l.b16 %v30
  %v51 = vunpack.c.l.b16 %v31
  %v52 = vunpack.c.l.b16 %v32
  %v53 = vpack.c.b16 %v50, %v49
  %v54 = vpack.c.b16 %v52, %v51
  %vm57 = vcmask 261120
  %v59 = vsel %vm57, %v44, 0
  %61 = vmatprep.subr.bf16.mxu0 0
  %62 = vmatpush1.bf16.msra.mxu0 %v53
  %63 = vmatprep.subr.bf16.mxu0 0
  %64 = vmatpush1.bf16.msra.mxu0 %v54
  %65 = vmatprep.subr.bf16.mxu0 0
  %66 = vmatpush1.bf16.msra.mxu0 0
  %67 = vmatprep.subr.bf16.mxu0 0
  %68 = vmatpush1.bf16.msra.mxu0 0
  %69 = vmatprep.subr.bf16.mxu0 0
  %70 = vmatpush1.bf16.msra.mxu0 0
  %71 = vmatprep.subr.bf16.mxu0 0
  %72 = vmatpush1.bf16.msra.mxu0 0
  %73 = vmatprep.subr.bf16.mxu0 0
  %74 = vmatpush1.bf16.msra.mxu0 0
  %75 = vmatprep.subr.bf16.mxu0 0
  %76 = vmatpush1.bf16.msra.mxu0 0
  %77 = vmatprep.subr.bf16.mxu0 0
  %78 = vmatpush1.bf16.msra.mxu0 0
  %79 = vmatprep.subr.bf16.mxu0 0
  %80 = vmatpush1.bf16.msra.mxu0 0
  %81 = vmatprep.subr.bf16.mxu0 0
  %82 = vmatpush1.bf16.msra.mxu0 0
  %83 = vmatprep.subr.bf16.mxu0 0
  %84 = vmatpush1.bf16.msra.mxu0 0
  %85 = vmatprep.subr.bf16.mxu0 0
  %86 = vmatpush1.bf16.msra.mxu0 0
  %87 = vmatprep.subr.bf16.mxu0 0
  %88 = vmatpush1.bf16.msra.mxu0 0
  %89 = vmatprep.subr.bf16.mxu0 0
  %90 = vmatpush1.bf16.msra.mxu0 0
  %91 = vmatprep.subr.bf16.mxu0 0
  %92 = vmatpush1.bf16.msra.mxu0 0
  %93 = vmatprep.mubr.bf16.mxu0 0
  %94 = vmatmul.mubr.bf16.gmra.mrb[0].mxu0 %v59
  %v95 = vpop.f32.mrb[0].mxu0
  %v96 = vadd.f32 %v38, %v95
  %v97 = vpop.f32.mrb[0].mxu0
  %v98 = vpop.f32.mrb[0].mxu0
  %v99 = vadd.f32 %v38, %v98
  %v100 = vpop.f32.mrb[0].mxu0
  %101 = vdwg.mxu0
  %v102 = vmax.f32 %v96, 0.0
  %v103 = vmax.f32 %v99, 0.0
  %v104 = vpack.c.bf16 %v103, %v102
  %v105 = vld [vmem:[%s3] sm:$0xf]
  %v106 = vld [vmem:[%s3 + $0x4] sm:$0xf]
  %v107 = vld [vmem:[%s3 + $0x8] sm:$0xf]
  %v108 = vld [vmem:[%s3 + $0xc] sm:$0xf]
  %v109 = vld [vmem:[%s3 + $0x10] sm:$0xf]
  %v110 = vld [vmem:[%s3 + $0x14] sm:$0xf]
  %v111 = vld [vmem:[%s3 + $0x18] sm:$0xf]
  %v112 = vld [vmem:[%s3 + $0x1c] sm:$0xf]
  %v113 = vld [vmem:[%s3 + $0x20] sm:$0xf]
  %v114 = vld [vmem:[%s3 + $0x24] sm:$0xf]
  %v115 = vld [vmem:[%s3 + $0x28] sm:$0xf]
  %v116 = vld [vmem:[%s3 + $0x2c] sm:$0xf]
  %v117 = vld [vmem:[%s3 + $0x30] sm:$0xf]
  %v118 = vld [vmem:[%s3 + $0x34] sm:$0xf]
  %v119 = vld [vmem:[%s3 + $0x38] sm:$0xf]
  %v120 = vld [vmem:[%s3 + $0x3c] sm:$0xf]
  %v121 = vld [vmem:[%s4] sm:$0x1]
  %v123 = vlaneseq
  %v124 = vshrl.u32 %v123, 7
  %v125 = vsub.s32 0, %v124
  %v126 = vrot.slane %v121, %v125
  %v144 = vunpack.c.l.b16 %v105
  %v145 = vunpack.c.l.b16 %v106
  %v146 = vunpack.c.l.b16 %v107
  %v147 = vunpack.c.l.b16 %v108
  %v148 = vunpack.c.l.b16 %v109
  %v149 = vunpack.c.l.b16 %v110
  %v150 = vunpack.c.l.b16 %v111
  %v151 = vunpack.c.l.b16 %v112
  %v152 = vunpack.c.l.b16 %v113
  %v153 = vunpack.c.l.b16 %v114
  %v154 = vunpack.c.l.b16 %v115
  %v155 = vunpack.c.l.b16 %v116
  %v156 = vunpack.c.l.b16 %v117
  %v157 = vunpack.c.l.b16 %v118
  %v158 = vunpack.c.l.b16 %v119
  %v159 = vunpack.c.l.b16 %v120
  %v160 = vpack.c.b16 %v145, %v144
  %v161 = vpack.c.b16 %v147, %v146
  %v162 = vpack.c.b16 %v149, %v148
  %v163 = vpack.c.b16 %v151, %v150
  %v164 = vpack.c.b16 %v153, %v152
  %v165 = vpack.c.b16 %v155, %v154
  %v166 = vpack.c.b16 %v157, %v156
  %v167 = vpack.c.b16 %v159, %v158
  %176 = vmatprep.subr.bf16.mxu0 0
  %177 = vmatpush1.bf16.msra.mxu0 %v160
  %178 = vmatprep.subr.bf16.mxu0 0
  %179 = vmatpush1.bf16.msra.mxu0 %v161
  %180 = vmatprep.subr.bf16.mxu0 0
  %181 = vmatpush1.bf16.msra.mxu0 %v162
  %182 = vmatprep.subr.bf16.mxu0 0
  %183 = vmatpush1.bf16.msra.mxu0 %v163
  %184 = vmatprep.subr.bf16.mxu0 0
  %185 = vmatpush1.bf16.msra.mxu0 %v164
  %186 = vmatprep.subr.bf16.mxu0 0
  %187 = vmatpush1.bf16.msra.mxu0 %v165
  %188 = vmatprep.subr.bf16.mxu0 0
  %189 = vmatpush1.bf16.msra.mxu0 %v166
  %190 = vmatprep.subr.bf16.mxu0 0
  %191 = vmatpush1.bf16.msra.mxu0 %v167
  %192 = vmatprep.subr.bf16.mxu0 0
  %193 = vmatpush1.bf16.msra.mxu0 0
  %194 = vmatprep.subr.bf16.mxu0 0
  %195 = vmatpush1.bf16.msra.mxu0 0
  %196 = vmatprep.subr.bf16.mxu0 0
  %197 = vmatpush1.bf16.msra.mxu0 0
  %198 = vmatprep.subr.bf16.mxu0 0
  %199 = vmatpush1.bf16.msra.mxu0 0
  %200 = vmatprep.subr.bf16.mxu0 0
  %201 = vmatpush1.bf16.msra.mxu0 0
  %202 = vmatprep.subr.bf16.mxu0 0
  %203 = vmatpush1.bf16.msra.mxu0 0
  %204 = vmatprep.subr.bf16.mxu0 0
  %205 = vmatpush1.bf16.msra.mxu0 0
  %206 = vmatprep.subr.bf16.mxu0 0
  %207 = vmatpush1.bf16.msra.mxu0 0
  %208 = vmatprep.mubr.bf16.mxu0 0
  %209 = vmatmul.mubr.bf16.gmra.mrb[0].mxu0 %v104
  %v210 = vpop.f32.mrb[0].mxu0
  %v211 = vadd.f32 %v126, %v210
  %v212 = vpop.f32.mrb[0].mxu0
  %v213 = vpop.f32.mrb[0].mxu0
  %v214 = vadd.f32 %v126, %v213
  %v215 = vpop.f32.mrb[0].mxu0
  %216 = vdwg.mxu0
  %v217 = vmax.f32 %v211, 0.0
  %v218 = vmax.f32 %v214, 0.0
  %v219 = vpack.c.bf16 %v218, %v217
  %v220 = vld [vmem:[%s5] sm:$0xf]
  %v221 = vld [vmem:[%s5 + $0x4] sm:$0xf]
  %v222 = vld [vmem:[%s5 + $0x8] sm:$0xf]
  %v223 = vld [vmem:[%s5 + $0xc] sm:$0xf]
  %v224 = vld [vmem:[%s5 + $0x10] sm:$0xf]
  %v225 = vld [vmem:[%s5 + $0x14] sm:$0xf]
  %v226 = vld [vmem:[%s5 + $0x18] sm:$0xf]
  %v227 = vld [vmem:[%s5 + $0x1c] sm:$0xf]
  %v228 = vld [vmem:[%s5 + $0x20] sm:$0xf]
  %v229 = vld [vmem:[%s5 + $0x24] sm:$0xf]
  %v230 = vld [vmem:[%s5 + $0x28] sm:$0xf]
  %v231 = vld [vmem:[%s5 + $0x2c] sm:$0xf]
  %v232 = vld [vmem:[%s5 + $0x30] sm:$0xf]
  %v233 = vld [vmem:[%s5 + $0x34] sm:$0xf]
  %v234 = vld [vmem:[%s5 + $0x38] sm:$0xf]
  %v235 = vld [vmem:[%s5 + $0x3c] sm:$0xf]
  %v236 = vld [vmem:[%s6] sm:$0x1]
  %v238 = vlaneseq
  %v239 = vshrl.u32 %v238, 7
  %v240 = vsub.s32 0, %v239
  %v241 = vrot.slane %v236, %v240
  %v259 = vunpack.c.l.b16 %v220
  %v260 = vunpack.c.l.b16 %v221
  %v261 = vunpack.c.l.b16 %v222
  %v262 = vunpack.c.l.b16 %v223
  %v263 = vunpack.c.l.b16 %v224
  %v264 = vunpack.c.l.b16 %v225
  %v265 = vunpack.c.l.b16 %v226
  %v266 = vunpack.c.l.b16 %v227
  %v267 = vunpack.c.l.b16 %v228
  %v268 = vunpack.c.l.b16 %v229
  %v269 = vunpack.c.l.b16 %v230
  %v270 = vunpack.c.l.b16 %v231
  %v271 = vunpack.c.l.b16 %v232
  %v272 = vunpack.c.l.b16 %v233
  %v273 = vunpack.c.l.b16 %v234
  %v274 = vunpack.c.l.b16 %v235
  %v275 = vpack.c.b16 %v260, %v259
  %v276 = vpack.c.b16 %v262, %v261
  %v277 = vpack.c.b16 %v264, %v263
  %v278 = vpack.c.b16 %v266, %v265
  %v279 = vpack.c.b16 %v268, %v267
  %v280 = vpack.c.b16 %v270, %v269
  %v281 = vpack.c.b16 %v272, %v271
  %v282 = vpack.c.b16 %v274, %v273
  %291 = vmatprep.subr.bf16.mxu0 0
  %292 = vmatpush1.bf16.msra.mxu0 %v275
  %293 = vmatprep.subr.bf16.mxu0 0
  %294 = vmatpush1.bf16.msra.mxu0 %v276
  %295 = vmatprep.subr.bf16.mxu0 0
  %296 = vmatpush1.bf16.msra.mxu0 %v277
  %297 = vmatprep.subr.bf16.mxu0 0
  %298 = vmatpush1.bf16.msra.mxu0 %v278
  %299 = vmatprep.subr.bf16.mxu0 0
  %300 = vmatpush1.bf16.msra.mxu0 %v279
  %301 = vmatprep.subr.bf16.mxu0 0
  %302 = vmatpush1.bf16.msra.mxu0 %v280
  %303 = vmatprep.subr.bf16.mxu0 0
  %304 = vmatpush1.bf16.msra.mxu0 %v281
  %305 = vmatprep.subr.bf16.mxu0 0
  %306 = vmatpush1.bf16.msra.mxu0 %v282
  %307 = vmatprep.subr.bf16.mxu0 0
  %308 = vmatpush1.bf16.msra.mxu0 0
  %309 = vmatprep.subr.bf16.mxu0 0
  %310 = vmatpush1.bf16.msra.mxu0 0
  %311 = vmatprep.subr.bf16.mxu0 0
  %312 = vmatpush1.bf16.msra.mxu0 0
  %313 = vmatprep.subr.bf16.mxu0 0
  %314 = vmatpush1.bf16.msra.mxu0 0
  %315 = vmatprep.subr.bf16.mxu0 0
  %316 = vmatpush1.bf16.msra.mxu0 0
  %317 = vmatprep.subr.bf16.mxu0 0
  %318 = vmatpush1.bf16.msra.mxu0 0
  %319 = vmatprep.subr.bf16.mxu0 0
  %320 = vmatpush1.bf16.msra.mxu0 0
  %321 = vmatprep.subr.bf16.mxu0 0
  %322 = vmatpush1.bf16.msra.mxu0 0
  %323 = vmatprep.mubr.bf16.mxu0 0
  %324 = vmatmul.mubr.bf16.gmra.mrb[0].mxu0 %v219
  %v325 = vpop.f32.mrb[0].mxu0
  %v326 = vadd.f32 %v241, %v325
  %v327 = vpop.f32.mrb[0].mxu0
  %v328 = vpop.f32.mrb[0].mxu0
  %v329 = vadd.f32 %v241, %v328
  %v330 = vpop.f32.mrb[0].mxu0
  %331 = vdwg.mxu0
  %v332 = vxor.u32 %v326, 2147483648
  %v333 = vxor.u32 %v329, 2147483648
  %v334 = vmul.f32 %v332, 1.442695
  %v335 = vpow.pop %v334
  %v336 = vmul.f32 %v333, 1.442695
  %v337 = vpow.pop %v336
  %v338 = vadd.f32 %v335, 1.0
  %v339 = vadd.f32 %v337, 1.0
  %v340 = vrcp.pop %v338
  %v341 = vmul.f32 1.0, %v340
  %v342 = vrcp.pop %v339
  %v343 = vmul.f32 1.0, %v342
  %344 = vst [vmem:[%s7] sm:$0xff] %v341
  %345 = vst [vmem:[%s7 + $0x8] sm:$0xff] %v343
  // Predicated region
  $region30: #{bootstraps_decoder_forward.1} parent=0 // pred_check
    _
  $region31: #{bootstraps_decoder_forward.1} parent=0 // pred_check_branch
    %347 = sbr.rel (0) target = $region33
  $region32: #{bootstraps_decoder_forward.1} parent=0 // pred_region
    _
  $region33: #{bootstraps_decoder_forward.1} parent=0 // pred_fallthru
    _
  // Predicated region
  $region34: #{bootstraps_decoder_forward.1} parent=0 // pred_check
    _
  $region35: #{bootstraps_decoder_forward.1} parent=0 // pred_check_branch
    %349 = sbr.rel (0) target = $region37
  $region36: #{bootstraps_decoder_forward.1} parent=0 // pred_region
    _
  $region37: #{bootstraps_decoder_forward.1} parent=0 // pred_fallthru
    _

</llo_original>
